<compile_context>
chip_gen: v7x
topology: tpu7x:2x2x1
jax: 0.10.0
libtpu: 0.0.40
codegen_flags: <defaults>
</compile_context>

<pallas_src>
import functools

import jax
import jax.numpy as jnp
from jax.experimental import pallas as pl
from jax.experimental.pallas import tpu as pltpu


# ----------------------------------------------------------------------------
# Pallas kernel: the whole BN -> swish -> conv3x3 chain of one fusion block.
# Single grid step; static in-kernel loop over the L layers.
# ----------------------------------------------------------------------------
def _fusion_chain_kernel(x_ref, w_ref, g_ref, bt_ref, b_ref, p_ref, o_ref, *,
                         img_h, wsp):
    R, WC = o_ref.shape                       # R = B*H, WC = W*C (lane-dense)
    L = w_ref.shape[0]
    inv_n = 1.0 / float(R * wsp)              # 1 / (B*H*W) per-channel count

    # H-boundary row masks for the pad=1 conv; hoisted (built once, reused by
    # every layer of the static loop).
    row_ids = jax.lax.broadcasted_iota(jnp.int32, (R, WC), 0)
    not_first = (row_ids % img_h) != 0                 # row y-1 exists
    not_last = (row_ids % img_h) != (img_h - 1)        # row y+1 exists

    p_rep = p_ref[...]                                 # (WC, WC) bf16 0/1

    act = x_ref[...].astype(jnp.float32)               # layer-resident value

    for l in range(L):                                 # static unroll
        # ---- BatchNorm (training-mode batch stats): one bf16 MXU matmul ----
        # [x ; x*x] @ P gives per-channel sums already replicated across the
        # W groups of the (W*C) lane axis -> no fold/broadcast matmul pair.
        xb = act.astype(jnp.bfloat16)
        xx = jnp.concatenate([xb, xb * xb], axis=0)    # (2R, WC) bf16
        folded = jnp.dot(xx, p_rep, preferred_element_type=jnp.float32)
        mean = jnp.sum(folded[:R], axis=0, keepdims=True) * inv_n   # (1, WC)
        ex2 = jnp.sum(folded[R:], axis=0, keepdims=True) * inv_n    # (1, WC)
        var = jnp.maximum(ex2 - mean * mean, 0.0)      # biased variance
        scale = g_ref[l] * jax.lax.rsqrt(var + 1e-5)   # (1, WC)
        shift = bt_ref[l] - mean * scale               # (1, WC)
        xn = act * scale + shift

        # ---- swish: x * sigmoid(x); reciprocal on the EUP ------------------
        xs = xn * pl.reciprocal(1.0 + jnp.exp(-xn), approx=True)

        # ---- 3x3 conv (pad=1): ONE MXU matmul with K = 3*WC ----------------
        # W shifts + W zero-padding live in the host-built banded weights; H
        # shifts are XLU sublane rolls masked at each image's boundary rows.
        up = jnp.where(not_first, pltpu.roll(xs, 1, 0), 0.0)       # row y-1
        down = jnp.where(not_last, pltpu.roll(xs, R - 1, 0), 0.0)  # row y+1
        lhs = jnp.concatenate([up, xs, down], axis=1).astype(jnp.bfloat16)
        act = jnp.dot(lhs, w_ref[l],
                      preferred_element_type=jnp.float32) + b_ref[l]

    o_ref[...] = act.astype(o_ref.dtype)


def bn_swish_conv_chain(x_nhwc, block_params, p_mat):
    """Run the full BN+swish+conv3x3 chain of one fusion block in one kernel."""
    B, H2, Wsp, C = x_nhwc.shape
    WC = Wsp * C
    R = B * H2
    w = block_params['w_stack']       # (L, 3*WC, WC) bf16, K-stacked bands
    g = block_params['gamma_wc']      # (L, 1, WC) f32 (tiled per W group)
    bt = block_params['beta_wc']      # (L, 1, WC) f32
    bias = block_params['bias_wc']    # (L, 1, WC) f32
    L = int(w.shape[0])

    kernel = functools.partial(_fusion_chain_kernel, img_h=H2, wsp=Wsp)

    flops = L * (2 * R * (3 * WC) * WC + 2 * (2 * R) * WC * WC)
    transcendentals = L * (2 * R * WC + WC)
    bytes_accessed = int(2 * R * WC * 4 + w.size * 2 +
                         (g.size + bt.size + bias.size) * 4 + p_mat.size * 2)

    out = pl.pallas_call(
        kernel,
        out_shape=jax.ShapeDtypeStruct((R, WC), x_nhwc.dtype),
        cost_estimate=pl.CostEstimate(flops=flops,
                                      transcendentals=transcendentals,
                                      bytes_accessed=bytes_accessed),
        compiler_params=pltpu.CompilerParams(
            vmem_limit_bytes=32 * 1024 * 1024),
    )(x_nhwc.reshape(R, WC), w, g, bt, bias, p_mat)
    return out.reshape(B, H2, Wsp, C)


# ----------------------------------------------------------------------------
# Wavelet glue (pure index reshuffles — plain JAX, NHWC end-to-end)
# ----------------------------------------------------------------------------
def dwt_nhwc(x):
    x1 = x[:, 0::2, 0::2, :]
    x2 = x[:, 1::2, 0::2, :]
    x3 = x[:, 0::2, 1::2, :]
    x4 = x[:, 1::2, 1::2, :]
    x_ll = x1 + x2 + x3 + x4
    x_lh = -x1 - x3 + x2 + x4
    x_hl = -x1 + x3 - x2 + x4
    x_hh = x1 - x3 - x2 + x4
    return jnp.concatenate([x_ll, x_lh, x_hl, x_hh], axis=-1)


def iwt_nhwc(x):
    """Inverse DWT as a stack+reshape pixel shuffle (no strided scatters)."""
    B, H, W, C = x.shape
    c = C // 4
    x_ll, x_lh = x[..., :c], x[..., c:2 * c]
    x_hl, x_hh = x[..., 2 * c:3 * c], x[..., 3 * c:]
    p00 = (x_ll - x_lh - x_hl + x_hh) / 4   # out[0::2, 0::2]
    p10 = (x_ll - x_lh + x_hl - x_hh) / 4   # out[1::2, 0::2]
    p01 = (x_ll + x_lh - x_hl - x_hh) / 4   # out[0::2, 1::2]
    p11 = (x_ll + x_lh + x_hl + x_hh) / 4   # out[1::2, 1::2]
    row0 = jnp.stack([p00, p01], axis=3)    # (B, H, W, 2, c)   dx axis
    row1 = jnp.stack([p10, p11], axis=3)    # (B, H, W, 2, c)
    t = jnp.stack([row0, row1], axis=2)     # (B, H, 2, W, 2, c) dy axis
    return t.reshape(B, H * 2, W * 2, c)


# ----------------------------------------------------------------------------
# WTFusionBlock2D / WTFusion forward (NHWC internally, NCHW at the boundary)
# ----------------------------------------------------------------------------
def wtfusion_block(LF, HF, block_params, in_channels, fusion_type, p_mat):
    lf_w = dwt_nhwc(LF)                      # (B, H/2, W/2, 4C)
    hf_w = dwt_nhwc(HF)
    if fusion_type == 'HF':
        fus = jnp.concatenate(
            [lf_w[..., :in_channels], hf_w[..., in_channels:]], axis=-1)
    else:
        fus = jnp.concatenate(
            [lf_w[..., :3 * in_channels], hf_w[..., 3 * in_channels:]], axis=-1)
    fus = bn_swish_conv_chain(fus, block_params, p_mat)
    return iwt_nhwc(fus)                     # (B, H, W, C)


@functools.partial(jax.jit, static_argnames=('in_channels', 'fusion_type'))
def wtfusion_forward(LF_nchw, HF_nchw, params, p_mat, *,
                     in_channels, fusion_type='HF'):
    LF = jnp.transpose(LF_nchw, (0, 2, 3, 1))    # NCHW -> NHWC (once)
    HF = jnp.transpose(HF_nchw, (0, 2, 3, 1))
    for block_params in params:
        LF = wtfusion_block(LF, HF, block_params, in_channels, fusion_type,
                            p_mat)
    return jnp.transpose(LF, (0, 3, 1, 2))       # NHWC -> NCHW


# ----------------------------------------------------------------------------
# Parameter construction / host-side preprocessing
# ----------------------------------------------------------------------------
def _stacked_band_weights(w_hwio, Wsp):
    """(3,3,Cin,Cout) HWIO conv weight -> K-stacked banded matrix (3*WC, WC).

    band_dy[w_in*C + ci, w_out*C + co] = w[dy, dx, ci, co], dx = w_in - w_out + 1.
    Entries outside dx in {0,1,2} are zero == the W-direction zero padding of a
    pad=1 conv.  The three dy bands are concatenated along K so the conv is a
    single (B*H, 3*WC) @ (3*WC, WC) matmul.
    """
    bands = []
    for dy in range(3):
        band = jnp.zeros((Wsp * w_hwio.shape[2], Wsp * w_hwio.shape[3]),
                         jnp.float32)
        for dx in range(3):
            band = band + jnp.kron(jnp.eye(Wsp, k=1 - dx, dtype=jnp.float32),
                                   w_hwio[dy, dx].astype(jnp.float32))
        bands.append(band)
    return jnp.concatenate(bands, axis=0)


def preprocess_block_params(raw_block, Wsp):
    """raw_block: list of (gamma, beta, w_hwio(3,3,C,C), bias(C,)) per layer."""
    gammas, betas, ws, biases = [], [], [], []
    for g, b, w, bias in raw_block:
        gammas.append(jnp.tile(g, Wsp).reshape(1, -1))
        betas.append(jnp.tile(b, Wsp).reshape(1, -1))
        ws.append(_stacked_band_weights(w, Wsp))
        biases.append(jnp.tile(bias, Wsp).reshape(1, -1))
    return {'gamma_wc': jnp.stack(gammas).astype(jnp.float32),
            'beta_wc': jnp.stack(betas).astype(jnp.float32),
            'w_stack': jnp.stack(ws).astype(jnp.bfloat16),
            'bias_wc': jnp.stack(biases).astype(jnp.float32)}


def channel_replication_matrix(Wsp, C):
    """(WC, WC) 0/1 matrix: dot(x, P) sums each channel over the W groups of
    the fused (W*C) lane axis and leaves the result replicated per lane."""
    return jnp.tile(jnp.eye(C, dtype=jnp.float32), (Wsp, Wsp)).astype(jnp.bfloat16)


def init_params(key, in_channels, conv_nums, block_nums):
    c4 = in_channels * 4
    fan_in = c4 * 9
    bound = 1.0 / (fan_in ** 0.5)
    raw = []
    for _ in range(block_nums):
        block = []
        for _ in range(conv_nums):
            key, kw, kb = jax.random.split(key, 3)
            w = jax.random.uniform(kw, (3, 3, c4, c4), jnp.float32,
                                   -bound, bound)         # HWIO
            b = jax.random.uniform(kb, (c4,), jnp.float32, -bound, bound)
            gamma = jnp.ones((c4,), jnp.float32)          # BN default init
            beta = jnp.zeros((c4,), jnp.float32)
            block.append((gamma, beta, w, b))
        raw.append(block)
    return raw


if __name__ == "__main__":
    in_channels = 4
    conv_nums = 2
    block_nums = 2
    B, H, W = 2, 16, 16

    key = jax.random.PRNGKey(0)
    k_lf, k_hf, k_p = jax.random.split(key, 3)
    LF = jax.random.normal(k_lf, (B, in_channels, H, W), jnp.float32)
    HF = jax.random.normal(k_hf, (B, in_channels, H, W), jnp.float32)
    raw_params = init_params(k_p, in_channels, conv_nums, block_nums)

    c4 = in_channels * 4
    Wsp = W // 2                                  # spatial width after DWT
    params = [preprocess_block_params(b, Wsp) for b in raw_params]
    p_mat = channel_replication_matrix(Wsp, c4)

    out = wtfusion_forward(LF, HF, params, p_mat,
                           in_channels=in_channels, fusion_type='HF')
    out = jax.block_until_ready(out)
    assert out.shape == (B, in_channels, H, W), out.shape
    assert bool(jnp.all(jnp.isfinite(out)))
    print("KERNEL_OK")
</pallas_src>

<mosaic_0001>
module attributes {stable_mosaic.version = 11 : i64} {
  func.func @_fusion_chain_kernel(%arg0: memref<16x128xf32, #tpu.memory_space<vmem>>, %arg1: memref<2x384x128xbf16, #tpu.memory_space<vmem>>, %arg2: memref<2x1x128xf32, #tpu.memory_space<vmem>>, %arg3: memref<2x1x128xf32, #tpu.memory_space<vmem>>, %arg4: memref<2x1x128xf32, #tpu.memory_space<vmem>>, %arg5: memref<128x128xbf16, #tpu.memory_space<vmem>>, %arg6: memref<16x128xf32, #tpu.memory_space<vmem>>) attributes {dimension_semantics = [], scalar_prefetch = 0 : i64, scratch_operands = 0 : i64, tpu.core_type = #tpu.core_type<tc>} {
    %0 = tpu.iota {dimensions = array<i32: 0>} : vector<16x128xi32>
    %c8_i32 = arith.constant 8 : i32
    %c0_i32 = arith.constant 0 : i32
    %1 = arith.cmpi eq, %c8_i32, %c0_i32 : i32
    %c1_i32 = arith.constant 1 : i32
    %2 = arith.select %1, %c1_i32, %c8_i32 : i32
    %3 = vector.broadcast %2 : i32 to vector<16x128xi32>
    %4 = arith.remsi %0, %3 : vector<16x128xi32>
    %c0_i32_0 = arith.constant 0 : i32
    %5 = vector.broadcast %c0_i32_0 : i32 to vector<16x128xi32>
    %6 = arith.cmpi ne, %4, %5 : vector<16x128xi32>
    %c0_i32_1 = arith.constant 0 : i32
    %7 = vector.broadcast %c0_i32_1 : i32 to vector<16x128xi32>
    %8 = arith.cmpi slt, %4, %7 : vector<16x128xi32>
    %c0_i32_2 = arith.constant 0 : i32
    %9 = arith.cmpi slt, %2, %c0_i32_2 : i32
    %10 = vector.broadcast %9 : i1 to vector<16x128xi1>
    %11 = vector.broadcast %10 : vector<16x128xi1> to vector<16x128xi1>
    %12 = arith.xori %8, %11 : vector<16x128xi1>
    %13 = arith.andi %12, %6 : vector<16x128xi1>
    %14 = vector.broadcast %2 : i32 to vector<16x128xi32>
    %15 = arith.addi %4, %14 : vector<16x128xi32>
    %16 = arith.select %13, %15, %4 : vector<16x128xi1>, vector<16x128xi32>
    %c0_i32_3 = arith.constant 0 : i32
    %17 = vector.broadcast %c0_i32_3 : i32 to vector<16x128xi32>
    %18 = arith.cmpi ne, %16, %17 : vector<16x128xi32>
    %c8_i32_4 = arith.constant 8 : i32
    %c0_i32_5 = arith.constant 0 : i32
    %19 = arith.cmpi eq, %c8_i32_4, %c0_i32_5 : i32
    %c1_i32_6 = arith.constant 1 : i32
    %20 = arith.select %19, %c1_i32_6, %c8_i32_4 : i32
    %21 = vector.broadcast %20 : i32 to vector<16x128xi32>
    %22 = arith.remsi %0, %21 : vector<16x128xi32>
    %c0_i32_7 = arith.constant 0 : i32
    %23 = vector.broadcast %c0_i32_7 : i32 to vector<16x128xi32>
    %24 = arith.cmpi ne, %22, %23 : vector<16x128xi32>
    %c0_i32_8 = arith.constant 0 : i32
    %25 = vector.broadcast %c0_i32_8 : i32 to vector<16x128xi32>
    %26 = arith.cmpi slt, %22, %25 : vector<16x128xi32>
    %c0_i32_9 = arith.constant 0 : i32
    %27 = arith.cmpi slt, %20, %c0_i32_9 : i32
    %28 = vector.broadcast %27 : i1 to vector<16x128xi1>
    %29 = vector.broadcast %28 : vector<16x128xi1> to vector<16x128xi1>
    %30 = arith.xori %26, %29 : vector<16x128xi1>
    %31 = arith.andi %30, %24 : vector<16x128xi1>
    %32 = vector.broadcast %20 : i32 to vector<16x128xi32>
    %33 = arith.addi %22, %32 : vector<16x128xi32>
    %34 = arith.select %31, %33, %22 : vector<16x128xi1>, vector<16x128xi32>
    %c7_i32 = arith.constant 7 : i32
    %35 = vector.broadcast %c7_i32 : i32 to vector<16x128xi32>
    %36 = arith.cmpi ne, %34, %35 : vector<16x128xi32>
    %c0 = arith.constant 0 : index
    %c0_10 = arith.constant 0 : index
    %37 = vector.load %arg5[%c0, %c0_10] : memref<128x128xbf16, #tpu.memory_space<vmem>>, vector<128x128xbf16>
    %c0_11 = arith.constant 0 : index
    %c0_12 = arith.constant 0 : index
    %38 = vector.load %arg0[%c0_11, %c0_12] : memref<16x128xf32, #tpu.memory_space<vmem>>, vector<16x128xf32>
    %39 = arith.truncf %38 : vector<16x128xf32> to vector<16x128xbf16>
    %40 = arith.mulf %39, %39 : vector<16x128xbf16>
    %41 = tpu.concatenate %39, %40 in 0 : vector<16x128xbf16>, vector<16x128xbf16> -> vector<32x128xbf16>
    %cst = arith.constant dense<0.000000e+00> : vector<32x128xf32>
    %42 = tpu.matmul %41, %37, %cst {dimension_numbers = #tpu.dot_dimension_numbers<[1], [0], [0], [1], [0, 0, 1, 1], [], []>} : vector<32x128xbf16>, vector<128x128xbf16>, vector<32x128xf32> -> vector<32x128xf32>
    %43 = vector.extract_strided_slice %42 {offsets = [0, 0], sizes = [16, 128], strides = [1, 1]} : vector<32x128xf32> to vector<16x128xf32>
    %cst_13 = arith.constant dense<0.000000e+00> : vector<128xf32>
    %44 = vector.multi_reduction <add>, %43, %cst_13 [0] : vector<16x128xf32> to vector<128xf32>
    %45 = vector.shape_cast %44 : vector<128xf32> to vector<1x128xf32>
    %cst_14 = arith.constant 7.812500e-03 : f32
    %46 = vector.broadcast %cst_14 : f32 to vector<1x128xf32>
    %47 = arith.mulf %45, %46 : vector<1x128xf32>
    %48 = vector.extract_strided_slice %42 {offsets = [16, 0], sizes = [16, 128], strides = [1, 1]} : vector<32x128xf32> to vector<16x128xf32>
    %cst_15 = arith.constant dense<0.000000e+00> : vector<128xf32>
    %49 = vector.multi_reduction <add>, %48, %cst_15 [0] : vector<16x128xf32> to vector<128xf32>
    %50 = vector.shape_cast %49 : vector<128xf32> to vector<1x128xf32>
    %cst_16 = arith.constant 7.812500e-03 : f32
    %51 = vector.broadcast %cst_16 : f32 to vector<1x128xf32>
    %52 = arith.mulf %50, %51 : vector<1x128xf32>
    %53 = arith.mulf %47, %47 : vector<1x128xf32>
    %54 = arith.subf %52, %53 : vector<1x128xf32>
    %cst_17 = arith.constant 0.000000e+00 : f32
    %55 = vector.broadcast %cst_17 : f32 to vector<1x128xf32>
    %56 = arith.maximumf %54, %55 : vector<1x128xf32>
    %c0_18 = arith.constant 0 : index
    %c0_19 = arith.constant 0 : index
    %c0_20 = arith.constant 0 : index
    %57 = vector.load %arg2[%c0_18, %c0_19, %c0_20] : memref<2x1x128xf32, #tpu.memory_space<vmem>>, vector<1x1x128xf32>
    %58 = vector.shape_cast %57 : vector<1x1x128xf32> to vector<1x128xf32>
    %cst_21 = arith.constant 9.99999974E-6 : f32
    %59 = vector.broadcast %cst_21 : f32 to vector<1x128xf32>
    %60 = arith.addf %56, %59 : vector<1x128xf32>
    %61 = math.rsqrt %60 : vector<1x128xf32>
    %62 = arith.mulf %58, %61 : vector<1x128xf32>
    %c0_22 = arith.constant 0 : index
    %c0_23 = arith.constant 0 : index
    %c0_24 = arith.constant 0 : index
    %63 = vector.load %arg3[%c0_22, %c0_23, %c0_24] : memref<2x1x128xf32, #tpu.memory_space<vmem>>, vector<1x1x128xf32>
    %64 = vector.shape_cast %63 : vector<1x1x128xf32> to vector<1x128xf32>
    %65 = arith.mulf %47, %62 : vector<1x128xf32>
    %66 = arith.subf %64, %65 : vector<1x128xf32>
    %67 = vector.broadcast %62 : vector<1x128xf32> to vector<16x128xf32>
    %68 = arith.mulf %38, %67 : vector<16x128xf32>
    %69 = vector.broadcast %66 : vector<1x128xf32> to vector<16x128xf32>
    %70 = arith.addf %68, %69 : vector<16x128xf32>
    %cst_25 = arith.constant 0.000000e+00 : f32
    %71 = vector.broadcast %cst_25 : f32 to vector<16x128xf32>
    %72 = arith.subf %71, %70 : vector<16x128xf32>
    %73 = math.exp %72 : vector<16x128xf32>
    %cst_26 = arith.constant 1.000000e+00 : f32
    %74 = vector.broadcast %cst_26 : f32 to vector<16x128xf32>
    %75 = arith.addf %74, %73 : vector<16x128xf32>
    %76 = tpu.reciprocal %75 {approx = true} : vector<16x128xf32> -> vector<16x128xf32>
    %77 = arith.mulf %70, %76 : vector<16x128xf32>
    %c1_i32_27 = arith.constant 1 : i32
    %78 = tpu.dynamic_rotate %77 by %c1_i32_27 dim 0 : vector<16x128xf32>, i32 -> vector<16x128xf32>
    %cst_28 = arith.constant 0.000000e+00 : f32
    %79 = vector.broadcast %cst_28 : f32 to vector<16x128xf32>
    %80 = arith.select %18, %78, %79 : vector<16x128xi1>, vector<16x128xf32>
    %c15_i32 = arith.constant 15 : i32
    %81 = tpu.dynamic_rotate %77 by %c15_i32 dim 0 : vector<16x128xf32>, i32 -> vector<16x128xf32>
    %cst_29 = arith.constant 0.000000e+00 : f32
    %82 = vector.broadcast %cst_29 : f32 to vector<16x128xf32>
    %83 = arith.select %36, %81, %82 : vector<16x128xi1>, vector<16x128xf32>
    %84 = tpu.concatenate %80, %77, %83 in 1 : vector<16x128xf32>, vector<16x128xf32>, vector<16x128xf32> -> vector<16x384xf32>
    %85 = arith.truncf %84 : vector<16x384xf32> to vector<16x384xbf16>
    %c0_30 = arith.constant 0 : index
    %c0_31 = arith.constant 0 : index
    %c0_32 = arith.constant 0 : index
    %86 = vector.load %arg1[%c0_30, %c0_31, %c0_32] : memref<2x384x128xbf16, #tpu.memory_space<vmem>>, vector<1x384x128xbf16>
    %87 = vector.shape_cast %86 : vector<1x384x128xbf16> to vector<384x128xbf16>
    %cst_33 = arith.constant dense<0.000000e+00> : vector<16x128xf32>
    %88 = tpu.matmul %85, %87, %cst_33 {dimension_numbers = #tpu.dot_dimension_numbers<[1], [0], [0], [1], [0, 0, 1, 1], [], []>} : vector<16x384xbf16>, vector<384x128xbf16>, vector<16x128xf32> -> vector<16x128xf32>
    %c0_34 = arith.constant 0 : index
    %c0_35 = arith.constant 0 : index
    %c0_36 = arith.constant 0 : index
    %89 = vector.load %arg4[%c0_34, %c0_35, %c0_36] : memref<2x1x128xf32, #tpu.memory_space<vmem>>, vector<1x1x128xf32>
    %90 = vector.shape_cast %89 : vector<1x1x128xf32> to vector<1x128xf32>
    %91 = vector.broadcast %90 : vector<1x128xf32> to vector<16x128xf32>
    %92 = arith.addf %88, %91 : vector<16x128xf32>
    %93 = arith.truncf %92 : vector<16x128xf32> to vector<16x128xbf16>
    %94 = arith.mulf %93, %93 : vector<16x128xbf16>
    %95 = tpu.concatenate %93, %94 in 0 : vector<16x128xbf16>, vector<16x128xbf16> -> vector<32x128xbf16>
    %cst_37 = arith.constant dense<0.000000e+00> : vector<32x128xf32>
    %96 = tpu.matmul %95, %37, %cst_37 {dimension_numbers = #tpu.dot_dimension_numbers<[1], [0], [0], [1], [0, 0, 1, 1], [], []>} : vector<32x128xbf16>, vector<128x128xbf16>, vector<32x128xf32> -> vector<32x128xf32>
    %97 = vector.extract_strided_slice %96 {offsets = [0, 0], sizes = [16, 128], strides = [1, 1]} : vector<32x128xf32> to vector<16x128xf32>
    %cst_38 = arith.constant dense<0.000000e+00> : vector<128xf32>
    %98 = vector.multi_reduction <add>, %97, %cst_38 [0] : vector<16x128xf32> to vector<128xf32>
    %99 = vector.shape_cast %98 : vector<128xf32> to vector<1x128xf32>
    %cst_39 = arith.constant 7.812500e-03 : f32
    %100 = vector.broadcast %cst_39 : f32 to vector<1x128xf32>
    %101 = arith.mulf %99, %100 : vector<1x128xf32>
    %102 = vector.extract_strided_slice %96 {offsets = [16, 0], sizes = [16, 128], strides = [1, 1]} : vector<32x128xf32> to vector<16x128xf32>
    %cst_40 = arith.constant dense<0.000000e+00> : vector<128xf32>
    %103 = vector.multi_reduction <add>, %102, %cst_40 [0] : vector<16x128xf32> to vector<128xf32>
    %104 = vector.shape_cast %103 : vector<128xf32> to vector<1x128xf32>
    %cst_41 = arith.constant 7.812500e-03 : f32
    %105 = vector.broadcast %cst_41 : f32 to vector<1x128xf32>
    %106 = arith.mulf %104, %105 : vector<1x128xf32>
    %107 = arith.mulf %101, %101 : vector<1x128xf32>
    %108 = arith.subf %106, %107 : vector<1x128xf32>
    %cst_42 = arith.constant 0.000000e+00 : f32
    %109 = vector.broadcast %cst_42 : f32 to vector<1x128xf32>
    %110 = arith.maximumf %108, %109 : vector<1x128xf32>
    %c1 = arith.constant 1 : index
    %c0_43 = arith.constant 0 : index
    %c0_44 = arith.constant 0 : index
    %111 = vector.load %arg2[%c1, %c0_43, %c0_44] : memref<2x1x128xf32, #tpu.memory_space<vmem>>, vector<1x1x128xf32>
    %112 = vector.shape_cast %111 : vector<1x1x128xf32> to vector<1x128xf32>
    %cst_45 = arith.constant 9.99999974E-6 : f32
    %113 = vector.broadcast %cst_45 : f32 to vector<1x128xf32>
    %114 = arith.addf %110, %113 : vector<1x128xf32>
    %115 = math.rsqrt %114 : vector<1x128xf32>
    %116 = arith.mulf %112, %115 : vector<1x128xf32>
    %c1_46 = arith.constant 1 : index
    %c0_47 = arith.constant 0 : index
    %c0_48 = arith.constant 0 : index
    %117 = vector.load %arg3[%c1_46, %c0_47, %c0_48] : memref<2x1x128xf32, #tpu.memory_space<vmem>>, vector<1x1x128xf32>
    %118 = vector.shape_cast %117 : vector<1x1x128xf32> to vector<1x128xf32>
    %119 = arith.mulf %101, %116 : vector<1x128xf32>
    %120 = arith.subf %118, %119 : vector<1x128xf32>
    %121 = vector.broadcast %116 : vector<1x128xf32> to vector<16x128xf32>
    %122 = arith.mulf %92, %121 : vector<16x128xf32>
    %123 = vector.broadcast %120 : vector<1x128xf32> to vector<16x128xf32>
    %124 = arith.addf %122, %123 : vector<16x128xf32>
    %cst_49 = arith.constant 0.000000e+00 : f32
    %125 = vector.broadcast %cst_49 : f32 to vector<16x128xf32>
    %126 = arith.subf %125, %124 : vector<16x128xf32>
    %127 = math.exp %126 : vector<16x128xf32>
    %cst_50 = arith.constant 1.000000e+00 : f32
    %128 = vector.broadcast %cst_50 : f32 to vector<16x128xf32>
    %129 = arith.addf %128, %127 : vector<16x128xf32>
    %130 = tpu.reciprocal %129 {approx = true} : vector<16x128xf32> -> vector<16x128xf32>
    %131 = arith.mulf %124, %130 : vector<16x128xf32>
    %c1_i32_51 = arith.constant 1 : i32
    %132 = tpu.dynamic_rotate %131 by %c1_i32_51 dim 0 : vector<16x128xf32>, i32 -> vector<16x128xf32>
    %cst_52 = arith.constant 0.000000e+00 : f32
    %133 = vector.broadcast %cst_52 : f32 to vector<16x128xf32>
    %134 = arith.select %18, %132, %133 : vector<16x128xi1>, vector<16x128xf32>
    %c15_i32_53 = arith.constant 15 : i32
    %135 = tpu.dynamic_rotate %131 by %c15_i32_53 dim 0 : vector<16x128xf32>, i32 -> vector<16x128xf32>
    %cst_54 = arith.constant 0.000000e+00 : f32
    %136 = vector.broadcast %cst_54 : f32 to vector<16x128xf32>
    %137 = arith.select %36, %135, %136 : vector<16x128xi1>, vector<16x128xf32>
    %138 = tpu.concatenate %134, %131, %137 in 1 : vector<16x128xf32>, vector<16x128xf32>, vector<16x128xf32> -> vector<16x384xf32>
    %139 = arith.truncf %138 : vector<16x384xf32> to vector<16x384xbf16>
    %c1_55 = arith.constant 1 : index
    %c0_56 = arith.constant 0 : index
    %c0_57 = arith.constant 0 : index
    %140 = vector.load %arg1[%c1_55, %c0_56, %c0_57] : memref<2x384x128xbf16, #tpu.memory_space<vmem>>, vector<1x384x128xbf16>
    %141 = vector.shape_cast %140 : vector<1x384x128xbf16> to vector<384x128xbf16>
    %cst_58 = arith.constant dense<0.000000e+00> : vector<16x128xf32>
    %142 = tpu.matmul %139, %141, %cst_58 {dimension_numbers = #tpu.dot_dimension_numbers<[1], [0], [0], [1], [0, 0, 1, 1], [], []>} : vector<16x384xbf16>, vector<384x128xbf16>, vector<16x128xf32> -> vector<16x128xf32>
    %c1_59 = arith.constant 1 : index
    %c0_60 = arith.constant 0 : index
    %c0_61 = arith.constant 0 : index
    %143 = vector.load %arg4[%c1_59, %c0_60, %c0_61] : memref<2x1x128xf32, #tpu.memory_space<vmem>>, vector<1x1x128xf32>
    %144 = vector.shape_cast %143 : vector<1x1x128xf32> to vector<1x128xf32>
    %145 = vector.broadcast %144 : vector<1x128xf32> to vector<16x128xf32>
    %146 = arith.addf %142, %145 : vector<16x128xf32>
    %c0_62 = arith.constant 0 : index
    %c0_63 = arith.constant 0 : index
    %147 = vector.load %arg6[%c0_62, %c0_63] : memref<16x128xf32, #tpu.memory_space<vmem>>, vector<16x128xf32>
    tpu.vector_store %arg6[%c0_62, %c0_63], %146 {strides = array<i32>} : memref<16x128xf32, #tpu.memory_space<vmem>>, vector<16x128xf32>,
    return
  }
}

</mosaic_0001>

<llo_original>
// kernel: wtfusion_forward.2
$region0: #{wtfusion_forward.2}
  #allocation0 [shape = 'u32[]', space=smem, size = 0x4, offset = 0x4, fixed_abs, tag = 'smem constant byte address 0x4 - core index']
  #allocation1 [shape = 'u32[144,128]{1,0:T(1,128)}', space=vmem, size = 0x12000, scoped, tag = 'internal scratch']
  %s0 = inlined_call_operand.vmem [shape: f32[16,128], index: 0, kind: input, shape index: {}]
  %s1 = inlined_call_operand.vmem [shape: bf16[2,384,128], index: 1, kind: input, shape index: {}]
  %s2 = inlined_call_operand.vmem [shape: f32[2,1,128], index: 2, kind: input, shape index: {}]
  %s3 = inlined_call_operand.vmem [shape: f32[2,1,128], index: 3, kind: input, shape index: {}]
  %s4 = inlined_call_operand.vmem [shape: f32[2,1,128], index: 4, kind: input, shape index: {}]
  %s5 = inlined_call_operand.vmem [shape: bf16[128,128], index: 5, kind: input, shape index: {}]
  %s6 = inlined_call_operand.vmem [shape: f32[16,128], index: 6, kind: output, shape index: {}]
  %s7 = sld [smem:[#allocation0]]
  $region34: #{wtfusion_forward.2} parent=0
    _
  %s9 = ssub.s32 1, %s7
  %s10 = scalar_select 0, %s9, %s7
  // Predicated region
  $region2: #{wtfusion_forward.2} parent=0 // pred_check
    _
  $region3: #{wtfusion_forward.2} parent=0 // pred_check_branch
    %12 = sbr.rel (0) target = $region5
  $region4: #{wtfusion_forward.2} parent=0 // pred_region
    _
  $region5: #{wtfusion_forward.2} parent=0 // pred_fallthru
    _
  // Predicated region
  $region6: #{wtfusion_forward.2} parent=0 // pred_check
    _
  $region7: #{wtfusion_forward.2} parent=0 // pred_check_branch
    %14 = sbr.rel (0) target = $region9
  $region8: #{wtfusion_forward.2} parent=0 // pred_region
    _
  $region9: #{wtfusion_forward.2} parent=0 // pred_fallthru
    _
  // Predicated region
  $region10: #{wtfusion_forward.2} parent=0 // pred_check
    _
  $region11: #{wtfusion_forward.2} parent=0 // pred_check_branch
    %16 = sbr.rel (0) target = $region13
  $region12: #{wtfusion_forward.2} parent=0 // pred_region
    _
  $region13: #{wtfusion_forward.2} parent=0 // pred_fallthru
    _
  // Predicated region
  $region14: #{wtfusion_forward.2} parent=0 // pred_check
    _
  $region15: #{wtfusion_forward.2} parent=0 // pred_check_branch
    %18 = sbr.rel (0) target = $region17
  $region16: #{wtfusion_forward.2} parent=0 // pred_region
    _
  $region17: #{wtfusion_forward.2} parent=0 // pred_fallthru
    _
  // Predicated region
  $region18: #{wtfusion_forward.2} parent=0 // pred_check
    _
  $region19: #{wtfusion_forward.2} parent=0 // pred_check_branch
    %20 = sbr.rel (0) target = $region21
  $region20: #{wtfusion_forward.2} parent=0 // pred_region
    _
  $region21: #{wtfusion_forward.2} parent=0 // pred_fallthru
    _
  // Predicated region
  $region22: #{wtfusion_forward.2} parent=0 // pred_check
    _
  $region23: #{wtfusion_forward.2} parent=0 // pred_check_branch
    %22 = sbr.rel (0) target = $region25
  $region24: #{wtfusion_forward.2} parent=0 // pred_region
    _
  $region25: #{wtfusion_forward.2} parent=0 // pred_fallthru
    _
  %v24 = vlaneseq
  %v25 = vshrl.u32 %v24, 7
  %v26 = vadd.s32 %v25, 8
  %vm27 = vcmp.lt.s32.totalorder %v25, 0
  %v28 = vsub.s32 0, %v25
  %v29 = vsel %vm27, %v28, %v25
  %v30 = vshrl.u32 %v29, 3
  %v31 = vand.u32 %v29, 7
  %v32 = vsub.s32 0, %v31
  %v33 = vsel %vm27, %v32, %v31
  %vm34 = vcmp.lt.s32.totalorder %v26, 0
  %v35 = vsub.s32 0, %v26
  %v36 = vsel %vm34, %v35, %v26
  %v37 = vshrl.u32 %v36, 3
  %v38 = vand.u32 %v36, 7
  %v39 = vsub.s32 0, %v38
  %v40 = vsel %vm34, %v39, %v38
  %vm41 = vcmp.ne.s32.totalorder %v33, 0
  %vm42 = vcmp.ne.s32.totalorder %v40, 0
  %vm43 = vcmp.lt.s32.totalorder %v33, 0
  %vm44 = vcmp.lt.s32.totalorder %v40, 0
  %vm45 = vmand %vm43, %vm41
  %vm46 = vmand %vm44, %vm42
  %v47 = vadd.s32 %v33, 8
  %v48 = vadd.s32 %v40, 8
  %v49 = vsel %vm45, %v47, %v33
  %v50 = vsel %vm46, %v48, %v40
  %vm51 = vcmp.ne.s32.totalorder %v49, 0
  %vm52 = vcmp.ne.s32.totalorder %v50, 0
  %vm53 = vcmp.ne.s32.totalorder %v49, 7
  %vm54 = vcmp.ne.s32.totalorder %v50, 7
  %v55 = vld [vmem:[%s5] sm:$0xf]
  %v56 = vld [vmem:[%s5 + $0x4] sm:$0xf]
  %v57 = vld [vmem:[%s5 + $0x8] sm:$0xf]
  %v58 = vld [vmem:[%s5 + $0xc] sm:$0xf]
  %v59 = vld [vmem:[%s5 + $0x10] sm:$0xf]
  %v60 = vld [vmem:[%s5 + $0x14] sm:$0xf]
  %v61 = vld [vmem:[%s5 + $0x18] sm:$0xf]
  %v62 = vld [vmem:[%s5 + $0x1c] sm:$0xf]
  %v63 = vld [vmem:[%s5 + $0x20] sm:$0xf]
  %v64 = vld [vmem:[%s5 + $0x24] sm:$0xf]
  %v65 = vld [vmem:[%s5 + $0x28] sm:$0xf]
  %v66 = vld [vmem:[%s5 + $0x2c] sm:$0xf]
  %v67 = vld [vmem:[%s5 + $0x30] sm:$0xf]
  %v68 = vld [vmem:[%s5 + $0x34] sm:$0xf]
  %v69 = vld [vmem:[%s5 + $0x38] sm:$0xf]
  %v70 = vld [vmem:[%s5 + $0x3c] sm:$0xf]
  %v71 = vld [vmem:[%s0] sm:$0xff]
  %v72 = vld [vmem:[%s0 + $0x8] sm:$0xff]
  %v73 = vpack.c.bf16 %v72, %v71
  %v74 = vmul.bf16 %v73, %v73
  %v91 = vunpack.c.l.b16 %v55
  %v92 = vunpack.c.l.b16 %v56
  %v93 = vunpack.c.l.b16 %v57
  %v94 = vunpack.c.l.b16 %v58
  %v95 = vunpack.c.l.b16 %v59
  %v96 = vunpack.c.l.b16 %v60
  %v97 = vunpack.c.l.b16 %v61
  %v98 = vunpack.c.l.b16 %v62
  %v99 = vunpack.c.l.b16 %v63
  %v100 = vunpack.c.l.b16 %v64
  %v101 = vunpack.c.l.b16 %v65
  %v102 = vunpack.c.l.b16 %v66
  %v103 = vunpack.c.l.b16 %v67
  %v104 = vunpack.c.l.b16 %v68
  %v105 = vunpack.c.l.b16 %v69
  %v106 = vunpack.c.l.b16 %v70
  %v107 = vpack.c.b16 %v92, %v91
  %v108 = vpack.c.b16 %v94, %v93
  %v109 = vpack.c.b16 %v96, %v95
  %v110 = vpack.c.b16 %v98, %v97
  %v111 = vpack.c.b16 %v100, %v99
  %v112 = vpack.c.b16 %v102, %v101
  %v113 = vpack.c.b16 %v104, %v103
  %v114 = vpack.c.b16 %v106, %v105
  %123 = vmatprep.subr.bf16.mxu0 0
  %124 = vmatpush1.bf16.msra.mxu0 %v107
  %125 = vmatprep.subr.bf16.mxu0 0
  %126 = vmatpush1.bf16.msra.mxu0 %v108
  %127 = vmatprep.subr.bf16.mxu0 0
  %128 = vmatpush1.bf16.msra.mxu0 %v109
  %129 = vmatprep.subr.bf16.mxu0 0
  %130 = vmatpush1.bf16.msra.mxu0 %v110
  %131 = vmatprep.subr.bf16.mxu0 0
  %132 = vmatpush1.bf16.msra.mxu0 %v111
  %133 = vmatprep.subr.bf16.mxu0 0
  %134 = vmatpush1.bf16.msra.mxu0 %v112
  %135 = vmatprep.subr.bf16.mxu0 0
  %136 = vmatpush1.bf16.msra.mxu0 %v113
  %137 = vmatprep.subr.bf16.mxu0 0
  %138 = vmatpush1.bf16.msra.mxu0 %v114
  %139 = vmatprep.subr.bf16.mxu0 0
  %140 = vmatpush1.bf16.msra.mxu0 0
  %141 = vmatprep.subr.bf16.mxu0 0
  %142 = vmatpush1.bf16.msra.mxu0 0
  %143 = vmatprep.subr.bf16.mxu0 0
  %144 = vmatpush1.bf16.msra.mxu0 0
  %145 = vmatprep.subr.bf16.mxu0 0
  %146 = vmatpush1.bf16.msra.mxu0 0
  %147 = vmatprep.subr.bf16.mxu0 0
  %148 = vmatpush1.bf16.msra.mxu0 0
  %149 = vmatprep.subr.bf16.mxu0 0
  %150 = vmatpush1.bf16.msra.mxu0 0
  %151 = vmatprep.subr.bf16.mxu0 0
  %152 = vmatpush1.bf16.msra.mxu0 0
  %153 = vmatprep.subr.bf16.mxu0 0
  %154 = vmatpush1.bf16.msra.mxu0 0
  %155 = vmatprep.mubr.bf16.mxu0 0
  %156 = vmatmul.mubr.bf16.gmra.mrb[0].mxu0 %v73
  %v157 = vpop.f32.mrb[0].mxu0
  %v158 = vadd.f32 0.0, %v157
  %v159 = vpop.f32.mrb[0].mxu0
  %v160 = vpop.f32.mrb[0].mxu0
  %v161 = vadd.f32 0.0, %v160
  %v162 = vpop.f32.mrb[0].mxu0
  %163 = vmatprep.mubr.bf16.mxu0 0
  %164 = vmatmul.mubr.bf16.gmra.mrb[0].mxu0 %v74
  %v165 = vpop.f32.mrb[0].mxu0
  %v166 = vadd.f32 0.0, %v165
  %v167 = vpop.f32.mrb[0].mxu0
  %v168 = vpop.f32.mrb[0].mxu0
  %v169 = vadd.f32 0.0, %v168
  %v170 = vpop.f32.mrb[0].mxu0
  %171 = vdwg.mxu0
  %v172 = vadd.f32 %v158, %v161
  %v173 = vrot.slane %v172, 4
  %v174 = vadd.f32 %v172, %v173
  %v175 = vrot.slane %v174, 2
  %v176 = vadd.f32 %v174, %v175
  %v177 = vrot.slane %v176, 1
  %v178 = vadd.f32 %v176, %v177
  %v179 = vmul.f32 %v178, 0.0078125
  %v180 = vadd.f32 %v166, %v169
  %v181 = vrot.slane %v180, 4
  %v182 = vadd.f32 %v180, %v181
  %v183 = vrot.slane %v182, 2
  %v184 = vadd.f32 %v182, %v183
  %v185 = vrot.slane %v184, 1
  %v186 = vadd.f32 %v184, %v185
  %v187 = vmul.f32 %v186, 0.0078125
  %v188 = vmul.f32 %v179, %v179
  %v189 = vsub.f32 %v187, %v188
  %v190 = vmax.f32 %v189, 0.0
  %v191 = vld [vmem:[%s2] sm:$0x1]
  %v192 = vadd.f32 %v190, 1e-05
  %v193 = vrsqrt.pop %v192
  %v194 = vmul.f32 %v191, %v193
  %v195 = vld [vmem:[%s3] sm:$0x1]
  %v196 = vmul.f32 %v179, %v194
  %v197 = vsub.f32 %v195, %v196
  %v199 = vlaneseq
  %v200 = vshrl.u32 %v199, 7
  %v201 = vsub.s32 0, %v200
  %v202 = vrot.slane %v194, %v201
  %v204 = vmul.f32 %v71, %v202
  %v205 = vmul.f32 %v72, %v202
  %v207 = vlaneseq
  %v208 = vshrl.u32 %v207, 7
  %v209 = vsub.s32 0, %v208
  %v210 = vrot.slane %v197, %v209
  %v212 = vadd.f32 %v204, %v210
  %v213 = vadd.f32 %v205, %v210
  %v214 = vsub.f32 0.0, %v212
  %v215 = vsub.f32 0.0, %v213
  %v216 = vmul.f32 %v214, 1.442695
  %v217 = vpow.pop %v216
  %v218 = vmul.f32 %v215, 1.442695
  %v219 = vpow.pop %v218
  %v220 = vadd.f32 %v217, 1.0
  %v221 = vadd.f32 %v219, 1.0
  %v222 = vrcp.pop %v220
  %v223 = vrcp.pop %v221
  %v224 = vmul.f32 %v212, %v222
  %v225 = vmul.f32 %v213, %v223
  %v226 = vrot.slane %v224, 7
  %v227 = vrot.slane %v225, 7
  %vm228 = vcmp.lt.s32.totalorder %v25, 1
  %v229 = vsel %vm228, %v226, %v227
  %v230 = vsel %vm228, %v227, %v226
  %v231 = vsel %vm51, %v230, 0.0
  %v232 = vsel %vm52, %v229, 0.0
  %v233 = vrot.slane %v224, 1
  %v234 = vrot.slane %v225, 1
  %vm235 = vcmp.lt.s32.totalorder %v25, 7
  %v236 = vsel %vm235, %v233, %v234
  %v237 = vsel %vm235, %v234, %v233
  %v238 = vsel %vm53, %v236, 0.0
  %v239 = vsel %vm54, %v237, 0.0
  %v240 = vpack.c.bf16 %v232, %v231
  %v241 = vpack.c.bf16 %v225, %v224
  %v242 = vpack.c.bf16 %v239, %v238
  %v243 = vld [vmem:[%s1] sm:$0xf]
  %v244 = vld [vmem:[%s1 + $0x4] sm:$0xf]
  %v245 = vld [vmem:[%s1 + $0x8] sm:$0xf]
  %v246 = vld [vmem:[%s1 + $0xc] sm:$0xf]
  %v247 = vld [vmem:[%s1 + $0x10] sm:$0xf]
  %v248 = vld [vmem:[%s1 + $0x14] sm:$0xf]
  %v249 = vld [vmem:[%s1 + $0x18] sm:$0xf]
  %v250 = vld [vmem:[%s1 + $0x1c] sm:$0xf]
  %v251 = vld [vmem:[%s1 + $0x20] sm:$0xf]
  %v252 = vld [vmem:[%s1 + $0x24] sm:$0xf]
  %v253 = vld [vmem:[%s1 + $0x28] sm:$0xf]
  %v254 = vld [vmem:[%s1 + $0x2c] sm:$0xf]
  %v255 = vld [vmem:[%s1 + $0x30] sm:$0xf]
  %v256 = vld [vmem:[%s1 + $0x34] sm:$0xf]
  %v257 = vld [vmem:[%s1 + $0x38] sm:$0xf]
  %v258 = vld [vmem:[%s1 + $0x3c] sm:$0xf]
  %v259 = vld [vmem:[%s1 + $0x40] sm:$0xf]
  %v260 = vld [vmem:[%s1 + $0x44] sm:$0xf]
  %v261 = vld [vmem:[%s1 + $0x48] sm:$0xf]
  %v262 = vld [vmem:[%s1 + $0x4c] sm:$0xf]
  %v263 = vld [vmem:[%s1 + $0x50] sm:$0xf]
  %v264 = vld [vmem:[%s1 + $0x54] sm:$0xf]
  %v265 = vld [vmem:[%s1 + $0x58] sm:$0xf]
  %v266 = vld [vmem:[%s1 + $0x5c] sm:$0xf]
  %v267 = vld [vmem:[%s1 + $0x60] sm:$0xf]
  %v268 = vld [vmem:[%s1 + $0x64] sm:$0xf]
  %v269 = vld [vmem:[%s1 + $0x68] sm:$0xf]
  %v270 = vld [vmem:[%s1 + $0x6c] sm:$0xf]
  %v271 = vld [vmem:[%s1 + $0x70] sm:$0xf]
  %v272 = vld [vmem:[%s1 + $0x74] sm:$0xf]
  %v273 = vld [vmem:[%s1 + $0x78] sm:$0xf]
  %v274 = vld [vmem:[%s1 + $0x7c] sm:$0xf]
  %v275 = vld [vmem:[%s1 + $0x80] sm:$0xf]
  %v276 = vld [vmem:[%s1 + $0x84] sm:$0xf]
  %v277 = vld [vmem:[%s1 + $0x88] sm:$0xf]
  %v278 = vld [vmem:[%s1 + $0x8c] sm:$0xf]
  %v279 = vld [vmem:[%s1 + $0x90] sm:$0xf]
  %v280 = vld [vmem:[%s1 + $0x94] sm:$0xf]
  %v281 = vld [vmem:[%s1 + $0x98] sm:$0xf]
  %v282 = vld [vmem:[%s1 + $0x9c] sm:$0xf]
  %v283 = vld [vmem:[%s1 + $0xa0] sm:$0xf]
  %v284 = vld [vmem:[%s1 + $0xa4] sm:$0xf]
  %v285 = vld [vmem:[%s1 + $0xa8] sm:$0xf]
  %v286 = vld [vmem:[%s1 + $0xac] sm:$0xf]
  %v287 = vld [vmem:[%s1 + $0xb0] sm:$0xf]
  %v288 = vld [vmem:[%s1 + $0xb4] sm:$0xf]
  %v289 = vld [vmem:[%s1 + $0xb8] sm:$0xf]
  %v290 = vld [vmem:[%s1 + $0xbc] sm:$0xf]
  %v291 = vld [vmem:[%s4] sm:$0x1]
  %v293 = vlaneseq
  %v294 = vshrl.u32 %v293, 7
  %v295 = vsub.s32 0, %v294
  %v296 = vrot.slane %v291, %v295
  %v346 = vunpack.c.l.b16 %v243
  %v347 = vunpack.c.l.b16 %v244
  %v348 = vunpack.c.l.b16 %v245
  %v349 = vunpack.c.l.b16 %v246
  %v350 = vunpack.c.l.b16 %v247
  %v351 = vunpack.c.l.b16 %v248
  %v352 = vunpack.c.l.b16 %v249
  %v353 = vunpack.c.l.b16 %v250
  %v354 = vunpack.c.l.b16 %v251
  %v355 = vunpack.c.l.b16 %v252
  %v356 = vunpack.c.l.b16 %v253
  %v357 = vunpack.c.l.b16 %v254
  %v358 = vunpack.c.l.b16 %v255
  %v359 = vunpack.c.l.b16 %v256
  %v360 = vunpack.c.l.b16 %v257
  %v361 = vunpack.c.l.b16 %v258
  %v362 = vunpack.c.l.b16 %v259
  %v363 = vunpack.c.l.b16 %v260
  %v364 = vunpack.c.l.b16 %v261
  %v365 = vunpack.c.l.b16 %v262
  %v366 = vunpack.c.l.b16 %v263
  %v367 = vunpack.c.l.b16 %v264
  %v368 = vunpack.c.l.b16 %v265
  %v369 = vunpack.c.l.b16 %v266
  %v370 = vunpack.c.l.b16 %v267
  %v371 = vunpack.c.l.b16 %v268
  %v372 = vunpack.c.l.b16 %v269
  %v373 = vunpack.c.l.b16 %v270
  %v374 = vunpack.c.l.b16 %v271
  %v375 = vunpack.c.l.b16 %v272
  %v376 = vunpack.c.l.b16 %v273
  %v377 = vunpack.c.l.b16 %v274
  %v378 = vunpack.c.l.b16 %v275
  %v379 = vunpack.c.l.b16 %v276
  %v380 = vunpack.c.l.b16 %v277
  %v381 = vunpack.c.l.b16 %v278
  %v382 = vunpack.c.l.b16 %v279
  %v383 = vunpack.c.l.b16 %v280
  %v384 = vunpack.c.l.b16 %v281
  %v385 = vunpack.c.l.b16 %v282
  %v386 = vunpack.c.l.b16 %v283
  %v387 = vunpack.c.l.b16 %v284
  %v388 = vunpack.c.l.b16 %v285
  %v389 = vunpack.c.l.b16 %v286
  %v390 = vunpack.c.l.b16 %v287
  %v391 = vunpack.c.l.b16 %v288
  %v392 = vunpack.c.l.b16 %v289
  %v393 = vunpack.c.l.b16 %v290
  %v394 = vpack.c.b16 %v347, %v346
  %v395 = vpack.c.b16 %v349, %v348
  %v396 = vpack.c.b16 %v351, %v350
  %v397 = vpack.c.b16 %v353, %v352
  %v398 = vpack.c.b16 %v355, %v354
  %v399 = vpack.c.b16 %v357, %v356
  %v400 = vpack.c.b16 %v359, %v358
  %v401 = vpack.c.b16 %v361, %v360
  %v402 = vpack.c.b16 %v363, %v362
  %v403 = vpack.c.b16 %v365, %v364
  %v404 = vpack.c.b16 %v367, %v366
  %v405 = vpack.c.b16 %v369, %v368
  %v406 = vpack.c.b16 %v371, %v370
  %v407 = vpack.c.b16 %v373, %v372
  %v408 = vpack.c.b16 %v375, %v374
  %v409 = vpack.c.b16 %v377, %v376
  %v410 = vpack.c.b16 %v379, %v378
  %v411 = vpack.c.b16 %v381, %v380
  %v412 = vpack.c.b16 %v383, %v382
  %v413 = vpack.c.b16 %v385, %v384
  %v414 = vpack.c.b16 %v387, %v386
  %v415 = vpack.c.b16 %v389, %v388
  %v416 = vpack.c.b16 %v391, %v390
  %v417 = vpack.c.b16 %v393, %v392
  %442 = vmatprep.subr.bf16.mxu0 0
  %443 = vmatpush1.bf16.msra.mxu0 %v394
  %444 = vmatprep.subr.bf16.mxu0 0
  %445 = vmatpush1.bf16.msra.mxu0 %v395
  %446 = vmatprep.subr.bf16.mxu0 0
  %447 = vmatpush1.bf16.msra.mxu0 %v396
  %448 = vmatprep.subr.bf16.mxu0 0
  %449 = vmatpush1.bf16.msra.mxu0 %v397
  %450 = vmatprep.subr.bf16.mxu0 0
  %451 = vmatpush1.bf16.msra.mxu0 %v398
  %452 = vmatprep.subr.bf16.mxu0 0
  %453 = vmatpush1.bf16.msra.mxu0 %v399
  %454 = vmatprep.subr.bf16.mxu0 0
  %455 = vmatpush1.bf16.msra.mxu0 %v400
  %456 = vmatprep.subr.bf16.mxu0 0
  %457 = vmatpush1.bf16.msra.mxu0 %v401
  %458 = vmatprep.subr.bf16.mxu0 0
  %459 = vmatpush1.bf16.msra.mxu0 %v402
  %460 = vmatprep.subr.bf16.mxu0 0
  %461 = vmatpush1.bf16.msra.mxu0 %v403
  %462 = vmatprep.subr.bf16.mxu0 0
  %463 = vmatpush1.bf16.msra.mxu0 %v404
  %464 = vmatprep.subr.bf16.mxu0 0
  %465 = vmatpush1.bf16.msra.mxu0 %v405
  %466 = vmatprep.subr.bf16.mxu0 0
  %467 = vmatpush1.bf16.msra.mxu0 %v406
  %468 = vmatprep.subr.bf16.mxu0 0
  %469 = vmatpush1.bf16.msra.mxu0 %v407
  %470 = vmatprep.subr.bf16.mxu0 0
  %471 = vmatpush1.bf16.msra.mxu0 %v408
  %472 = vmatprep.subr.bf16.mxu0 0
  %473 = vmatpush1.bf16.msra.mxu0 %v409
  %474 = vmatprep.mubr.bf16.mxu0 %v241
  %475 = vmatmul.mubr.bf16.gmra.mrb[0].mxu0 %v240
  %v476 = vpop.f32.mrb[0].mxu0
  %v477 = vadd.f32 %v296, %v476
  %v478 = vpop.f32.mrb[0].mxu0
  %v479 = vpop.f32.mrb[0].mxu0
  %v480 = vadd.f32 %v296, %v479
  %v481 = vpop.f32.mrb[0].mxu0
  %482 = vdwg.mxu0
  %483 = vmatprep.subr.bf16.mxu0 0
  %484 = vmatpush1.bf16.msra.mxu0 %v410
  %485 = vmatprep.subr.bf16.mxu0 0
  %486 = vmatpush1.bf16.msra.mxu0 %v411
  %487 = vmatprep.subr.bf16.mxu0 0
  %488 = vmatpush1.bf16.msra.mxu0 %v412
  %489 = vmatprep.subr.bf16.mxu0 0
  %490 = vmatpush1.bf16.msra.mxu0 %v413
  %491 = vmatprep.subr.bf16.mxu0 0
  %492 = vmatpush1.bf16.msra.mxu0 %v414
  %493 = vmatprep.subr.bf16.mxu0 0
  %494 = vmatpush1.bf16.msra.mxu0 %v415
  %495 = vmatprep.subr.bf16.mxu0 0
  %496 = vmatpush1.bf16.msra.mxu0 %v416
  %497 = vmatprep.subr.bf16.mxu0 0
  %498 = vmatpush1.bf16.msra.mxu0 %v417
  %499 = vmatprep.subr.bf16.mxu0 0
  %500 = vmatpush1.bf16.msra.mxu0 0
  %501 = vmatprep.subr.bf16.mxu0 0
  %502 = vmatpush1.bf16.msra.mxu0 0
  %503 = vmatprep.subr.bf16.mxu0 0
  %504 = vmatpush1.bf16.msra.mxu0 0
  %505 = vmatprep.subr.bf16.mxu0 0
  %506 = vmatpush1.bf16.msra.mxu0 0
  %507 = vmatprep.subr.bf16.mxu0 0
  %508 = vmatpush1.bf16.msra.mxu0 0
  %509 = vmatprep.subr.bf16.mxu0 0
  %510 = vmatpush1.bf16.msra.mxu0 0
  %511 = vmatprep.subr.bf16.mxu0 0
  %512 = vmatpush1.bf16.msra.mxu0 0
  %513 = vmatprep.subr.bf16.mxu0 0
  %514 = vmatpush1.bf16.msra.mxu0 0
  %515 = vmatprep.mubr.bf16.mxu0 0
  %516 = vmatmul.mubr.bf16.gmra.mrb[0].mxu0 %v242
  %v517 = vpop.f32.mrb[0].mxu0
  %v518 = vadd.f32 %v477, %v517
  %v519 = vpop.f32.mrb[0].mxu0
  %v520 = vpop.f32.mrb[0].mxu0
  %v521 = vadd.f32 %v480, %v520
  %v522 = vpop.f32.mrb[0].mxu0
  %523 = vdwg.mxu0
  %v524 = vpack.c.bf16 %v521, %v518
  %v525 = vmul.bf16 %v524, %v524
  %526 = vmatprep.subr.bf16.mxu0 0
  %527 = vmatpush1.bf16.msra.mxu0 %v107
  %528 = vmatprep.subr.bf16.mxu0 0
  %529 = vmatpush1.bf16.msra.mxu0 %v108
  %530 = vmatprep.subr.bf16.mxu0 0
  %531 = vmatpush1.bf16.msra.mxu0 %v109
  %532 = vmatprep.subr.bf16.mxu0 0
  %533 = vmatpush1.bf16.msra.mxu0 %v110
  %534 = vmatprep.subr.bf16.mxu0 0
  %535 = vmatpush1.bf16.msra.mxu0 %v111
  %536 = vmatprep.subr.bf16.mxu0 0
  %537 = vmatpush1.bf16.msra.mxu0 %v112
  %538 = vmatprep.subr.bf16.mxu0 0
  %539 = vmatpush1.bf16.msra.mxu0 %v113
  %540 = vmatprep.subr.bf16.mxu0 0
  %541 = vmatpush1.bf16.msra.mxu0 %v114
  %542 = vmatprep.subr.bf16.mxu0 0
  %543 = vmatpush1.bf16.msra.mxu0 0
  %544 = vmatprep.subr.bf16.mxu0 0
  %545 = vmatpush1.bf16.msra.mxu0 0
  %546 = vmatprep.subr.bf16.mxu0 0
  %547 = vmatpush1.bf16.msra.mxu0 0
  %548 = vmatprep.subr.bf16.mxu0 0
  %549 = vmatpush1.bf16.msra.mxu0 0
  %550 = vmatprep.subr.bf16.mxu0 0
  %551 = vmatpush1.bf16.msra.mxu0 0
  %552 = vmatprep.subr.bf16.mxu0 0
  %553 = vmatpush1.bf16.msra.mxu0 0
  %554 = vmatprep.subr.bf16.mxu0 0
  %555 = vmatpush1.bf16.msra.mxu0 0
  %556 = vmatprep.subr.bf16.mxu0 0
  %557 = vmatpush1.bf16.msra.mxu0 0
  %558 = vmatprep.mubr.bf16.mxu0 0
  %559 = vmatmul.mubr.bf16.gmra.mrb[0].mxu0 %v524
  %v560 = vpop.f32.mrb[0].mxu0
  %v561 = vadd.f32 0.0, %v560
  %v562 = vpop.f32.mrb[0].mxu0
  %v563 = vpop.f32.mrb[0].mxu0
  %v564 = vadd.f32 0.0, %v563
  %v565 = vpop.f32.mrb[0].mxu0
  %566 = vmatprep.mubr.bf16.mxu0 0
  %567 = vmatmul.mubr.bf16.gmra.mrb[0].mxu0 %v525
  %v568 = vpop.f32.mrb[0].mxu0
  %v569 = vadd.f32 0.0, %v568
  %v570 = vpop.f32.mrb[0].mxu0
  %v571 = vpop.f32.mrb[0].mxu0
  %v572 = vadd.f32 0.0, %v571
  %v573 = vpop.f32.mrb[0].mxu0
  %574 = vdwg.mxu0
  %v575 = vadd.f32 %v561, %v564
  %v576 = vrot.slane %v575, 4
  %v577 = vadd.f32 %v575, %v576
  %v578 = vrot.slane %v577, 2
  %v579 = vadd.f32 %v577, %v578
  %v580 = vrot.slane %v579, 1
  %v581 = vadd.f32 %v579, %v580
  %v582 = vmul.f32 %v581, 0.0078125
  %v583 = vadd.f32 %v569, %v572
  %v584 = vrot.slane %v583, 4
  %v585 = vadd.f32 %v583, %v584
  %v586 = vrot.slane %v585, 2
  %v587 = vadd.f32 %v585, %v586
  %v588 = vrot.slane %v587, 1
  %v589 = vadd.f32 %v587, %v588
  %v590 = vmul.f32 %v589, 0.0078125
  %v591 = vmul.f32 %v582, %v582
  %v592 = vsub.f32 %v590, %v591
  %v593 = vmax.f32 %v592, 0.0
  %s594 = scalar_lea.vmem %s2, 1
  %v595 = vld [vmem:[%s594] sm:$0x1]
  %v596 = vadd.f32 %v593, 1e-05
  %v597 = vrsqrt.pop %v596
  %v598 = vmul.f32 %v595, %v597
  %s599 = scalar_lea.vmem %s3, 1
  %v600 = vld [vmem:[%s599] sm:$0x1]
  %v601 = vmul.f32 %v582, %v598
  %v602 = vsub.f32 %v600, %v601
  %v604 = vlaneseq
  %v605 = vshrl.u32 %v604, 7
  %v606 = vsub.s32 0, %v605
  %v607 = vrot.slane %v598, %v606
  %v609 = vmul.f32 %v518, %v607
  %v610 = vmul.f32 %v521, %v607
  %v612 = vlaneseq
  %v613 = vshrl.u32 %v612, 7
  %v614 = vsub.s32 0, %v613
  %v615 = vrot.slane %v602, %v614
  %v617 = vadd.f32 %v609, %v615
  %v618 = vadd.f32 %v610, %v615
  %v619 = vsub.f32 0.0, %v617
  %v620 = vsub.f32 0.0, %v618
  %v621 = vmul.f32 %v619, 1.442695
  %v622 = vpow.pop %v621
  %v623 = vmul.f32 %v620, 1.442695
  %v624 = vpow.pop %v623
  %v625 = vadd.f32 %v622, 1.0
  %v626 = vadd.f32 %v624, 1.0
  %v627 = vrcp.pop %v625
  %v628 = vrcp.pop %v626
  %v629 = vmul.f32 %v617, %v627
  %v630 = vmul.f32 %v618, %v628
  %v631 = vrot.slane %v629, 7
  %v632 = vrot.slane %v630, 7
  %v633 = vsel %vm228, %v631, %v632
  %v634 = vsel %vm228, %v632, %v631
  %v635 = vsel %vm51, %v634, 0.0
  %v636 = vsel %vm52, %v633, 0.0
  %v637 = vrot.slane %v629, 1
  %v638 = vrot.slane %v630, 1
  %v639 = vsel %vm235, %v637, %v638
  %v640 = vsel %vm235, %v638, %v637
  %v641 = vsel %vm53, %v639, 0.0
  %v642 = vsel %vm54, %v640, 0.0
  %v643 = vpack.c.bf16 %v636, %v635
  %v644 = vpack.c.bf16 %v630, %v629
  %v645 = vpack.c.bf16 %v642, %v641
  %s646 = scalar_lea.vmem %s1, 192
  %v647 = vld [vmem:[%s646] sm:$0xf]
  %v648 = vld [vmem:[%s646 + $0x4] sm:$0xf]
  %v649 = vld [vmem:[%s646 + $0x8] sm:$0xf]
  %v650 = vld [vmem:[%s646 + $0xc] sm:$0xf]
  %v651 = vld [vmem:[%s646 + $0x10] sm:$0xf]
  %v652 = vld [vmem:[%s646 + $0x14] sm:$0xf]
  %v653 = vld [vmem:[%s646 + $0x18] sm:$0xf]
  %v654 = vld [vmem:[%s646 + $0x1c] sm:$0xf]
  %v655 = vld [vmem:[%s646 + $0x20] sm:$0xf]
  %v656 = vld [vmem:[%s646 + $0x24] sm:$0xf]
  %v657 = vld [vmem:[%s646 + $0x28] sm:$0xf]
  %v658 = vld [vmem:[%s646 + $0x2c] sm:$0xf]
  %v659 = vld [vmem:[%s646 + $0x30] sm:$0xf]
  %v660 = vld [vmem:[%s646 + $0x34] sm:$0xf]
  %v661 = vld [vmem:[%s646 + $0x38] sm:$0xf]
  %v662 = vld [vmem:[%s646 + $0x3c] sm:$0xf]
  %v663 = vld [vmem:[%s646 + $0x40] sm:$0xf]
  %v664 = vld [vmem:[%s646 + $0x44] sm:$0xf]
  %v665 = vld [vmem:[%s646 + $0x48] sm:$0xf]
  %v666 = vld [vmem:[%s646 + $0x4c] sm:$0xf]
  %v667 = vld [vmem:[%s646 + $0x50] sm:$0xf]
  %v668 = vld [vmem:[%s646 + $0x54] sm:$0xf]
  %v669 = vld [vmem:[%s646 + $0x58] sm:$0xf]
  %v670 = vld [vmem:[%s646 + $0x5c] sm:$0xf]
  %v671 = vld [vmem:[%s646 + $0x60] sm:$0xf]
  %v672 = vld [vmem:[%s646 + $0x64] sm:$0xf]
  %v673 = vld [vmem:[%s646 + $0x68] sm:$0xf]
  %v674 = vld [vmem:[%s646 + $0x6c] sm:$0xf]
  %v675 = vld [vmem:[%s646 + $0x70] sm:$0xf]
  %v676 = vld [vmem:[%s646 + $0x74] sm:$0xf]
  %v677 = vld [vmem:[%s646 + $0x78] sm:$0xf]
  %v678 = vld [vmem:[%s646 + $0x7c] sm:$0xf]
  %v679 = vld [vmem:[%s646 + $0x80] sm:$0xf]
  %v680 = vld [vmem:[%s646 + $0x84] sm:$0xf]
  %v681 = vld [vmem:[%s646 + $0x88] sm:$0xf]
  %v682 = vld [vmem:[%s646 + $0x8c] sm:$0xf]
  %v683 = vld [vmem:[%s646 + $0x90] sm:$0xf]
  %v684 = vld [vmem:[%s646 + $0x94] sm:$0xf]
  %v685 = vld [vmem:[%s646 + $0x98] sm:$0xf]
  %v686 = vld [vmem:[%s646 + $0x9c] sm:$0xf]
  %v687 = vld [vmem:[%s646 + $0xa0] sm:$0xf]
  %v688 = vld [vmem:[%s646 + $0xa4] sm:$0xf]
  %v689 = vld [vmem:[%s646 + $0xa8] sm:$0xf]
  %v690 = vld [vmem:[%s646 + $0xac] sm:$0xf]
  %v691 = vld [vmem:[%s646 + $0xb0] sm:$0xf]
  %v692 = vld [vmem:[%s646 + $0xb4] sm:$0xf]
  %v693 = vld [vmem:[%s646 + $0xb8] sm:$0xf]
  %v694 = vld [vmem:[%s646 + $0xbc] sm:$0xf]
  %s695 = scalar_lea.vmem %s4, 1
  %v696 = vld [vmem:[%s695] sm:$0x1]
  %v698 = vlaneseq
  %v699 = vshrl.u32 %v698, 7
  %v700 = vsub.s32 0, %v699
  %v701 = vrot.slane %v696, %v700
  %v751 = vunpack.c.l.b16 %v647
  %v752 = vunpack.c.l.b16 %v648
  %v753 = vunpack.c.l.b16 %v649
  %v754 = vunpack.c.l.b16 %v650
  %v755 = vunpack.c.l.b16 %v651
  %v756 = vunpack.c.l.b16 %v652
  %v757 = vunpack.c.l.b16 %v653
  %v758 = vunpack.c.l.b16 %v654
  %v759 = vunpack.c.l.b16 %v655
  %v760 = vunpack.c.l.b16 %v656
  %v761 = vunpack.c.l.b16 %v657
  %v762 = vunpack.c.l.b16 %v658
  %v763 = vunpack.c.l.b16 %v659
  %v764 = vunpack.c.l.b16 %v660
  %v765 = vunpack.c.l.b16 %v661
  %v766 = vunpack.c.l.b16 %v662
  %v767 = vunpack.c.l.b16 %v663
  %v768 = vunpack.c.l.b16 %v664
  %v769 = vunpack.c.l.b16 %v665
  %v770 = vunpack.c.l.b16 %v666
  %v771 = vunpack.c.l.b16 %v667
  %v772 = vunpack.c.l.b16 %v668
  %v773 = vunpack.c.l.b16 %v669
  %v774 = vunpack.c.l.b16 %v670
  %v775 = vunpack.c.l.b16 %v671
  %v776 = vunpack.c.l.b16 %v672
  %v777 = vunpack.c.l.b16 %v673
  %v778 = vunpack.c.l.b16 %v674
  %v779 = vunpack.c.l.b16 %v675
  %v780 = vunpack.c.l.b16 %v676
  %v781 = vunpack.c.l.b16 %v677
  %v782 = vunpack.c.l.b16 %v678
  %v783 = vunpack.c.l.b16 %v679
  %v784 = vunpack.c.l.b16 %v680
  %v785 = vunpack.c.l.b16 %v681
  %v786 = vunpack.c.l.b16 %v682
  %v787 = vunpack.c.l.b16 %v683
  %v788 = vunpack.c.l.b16 %v684
  %v789 = vunpack.c.l.b16 %v685
  %v790 = vunpack.c.l.b16 %v686
  %v791 = vunpack.c.l.b16 %v687
  %v792 = vunpack.c.l.b16 %v688
  %v793 = vunpack.c.l.b16 %v689
  %v794 = vunpack.c.l.b16 %v690
  %v795 = vunpack.c.l.b16 %v691
  %v796 = vunpack.c.l.b16 %v692
  %v797 = vunpack.c.l.b16 %v693
  %v798 = vunpack.c.l.b16 %v694
  %v799 = vpack.c.b16 %v752, %v751
  %v800 = vpack.c.b16 %v754, %v753
  %v801 = vpack.c.b16 %v756, %v755
  %v802 = vpack.c.b16 %v758, %v757
  %v803 = vpack.c.b16 %v760, %v759
  %v804 = vpack.c.b16 %v762, %v761
  %v805 = vpack.c.b16 %v764, %v763
  %v806 = vpack.c.b16 %v766, %v765
  %v807 = vpack.c.b16 %v768, %v767
  %v808 = vpack.c.b16 %v770, %v769
  %v809 = vpack.c.b16 %v772, %v771
  %v810 = vpack.c.b16 %v774, %v773
  %v811 = vpack.c.b16 %v776, %v775
  %v812 = vpack.c.b16 %v778, %v777
  %v813 = vpack.c.b16 %v780, %v779
  %v814 = vpack.c.b16 %v782, %v781
  %v815 = vpack.c.b16 %v784, %v783
  %v816 = vpack.c.b16 %v786, %v785
  %v817 = vpack.c.b16 %v788, %v787
  %v818 = vpack.c.b16 %v790, %v789
  %v819 = vpack.c.b16 %v792, %v791
  %v820 = vpack.c.b16 %v794, %v793
  %v821 = vpack.c.b16 %v796, %v795
  %v822 = vpack.c.b16 %v798, %v797
  %847 = vmatprep.subr.bf16.mxu0 0
  %848 = vmatpush1.bf16.msra.mxu0 %v799
  %849 = vmatprep.subr.bf16.mxu0 0
  %850 = vmatpush1.bf16.msra.mxu0 %v800
  %851 = vmatprep.subr.bf16.mxu0 0
  %852 = vmatpush1.bf16.msra.mxu0 %v801
  %853 = vmatprep.subr.bf16.mxu0 0
  %854 = vmatpush1.bf16.msra.mxu0 %v802
  %855 = vmatprep.subr.bf16.mxu0 0
  %856 = vmatpush1.bf16.msra.mxu0 %v803
  %857 = vmatprep.subr.bf16.mxu0 0
  %858 = vmatpush1.bf16.msra.mxu0 %v804
  %859 = vmatprep.subr.bf16.mxu0 0
  %860 = vmatpush1.bf16.msra.mxu0 %v805
  %861 = vmatprep.subr.bf16.mxu0 0
  %862 = vmatpush1.bf16.msra.mxu0 %v806
  %863 = vmatprep.subr.bf16.mxu0 0
  %864 = vmatpush1.bf16.msra.mxu0 %v807
  %865 = vmatprep.subr.bf16.mxu0 0
  %866 = vmatpush1.bf16.msra.mxu0 %v808
  %867 = vmatprep.subr.bf16.mxu0 0
  %868 = vmatpush1.bf16.msra.mxu0 %v809
  %869 = vmatprep.subr.bf16.mxu0 0
  %870 = vmatpush1.bf16.msra.mxu0 %v810
  %871 = vmatprep.subr.bf16.mxu0 0
  %872 = vmatpush1.bf16.msra.mxu0 %v811
  %873 = vmatprep.subr.bf16.mxu0 0
  %874 = vmatpush1.bf16.msra.mxu0 %v812
  %875 = vmatprep.subr.bf16.mxu0 0
  %876 = vmatpush1.bf16.msra.mxu0 %v813
  %877 = vmatprep.subr.bf16.mxu0 0
  %878 = vmatpush1.bf16.msra.mxu0 %v814
  %879 = vmatprep.mubr.bf16.mxu0 %v644
  %880 = vmatmul.mubr.bf16.gmra.mrb[0].mxu0 %v643
  %v881 = vpop.f32.mrb[0].mxu0
  %v882 = vadd.f32 %v701, %v881
  %v883 = vpop.f32.mrb[0].mxu0
  %v884 = vpop.f32.mrb[0].mxu0
  %v885 = vadd.f32 %v701, %v884
  %v886 = vpop.f32.mrb[0].mxu0
  %887 = vdwg.mxu0
  %888 = vmatprep.subr.bf16.mxu0 0
  %889 = vmatpush1.bf16.msra.mxu0 %v815
  %890 = vmatprep.subr.bf16.mxu0 0
  %891 = vmatpush1.bf16.msra.mxu0 %v816
  %892 = vmatprep.subr.bf16.mxu0 0
  %893 = vmatpush1.bf16.msra.mxu0 %v817
  %894 = vmatprep.subr.bf16.mxu0 0
  %895 = vmatpush1.bf16.msra.mxu0 %v818
  %896 = vmatprep.subr.bf16.mxu0 0
  %897 = vmatpush1.bf16.msra.mxu0 %v819
  %898 = vmatprep.subr.bf16.mxu0 0
  %899 = vmatpush1.bf16.msra.mxu0 %v820
  %900 = vmatprep.subr.bf16.mxu0 0
  %901 = vmatpush1.bf16.msra.mxu0 %v821
  %902 = vmatprep.subr.bf16.mxu0 0
  %903 = vmatpush1.bf16.msra.mxu0 %v822
  %904 = vmatprep.subr.bf16.mxu0 0
  %905 = vmatpush1.bf16.msra.mxu0 0
  %906 = vmatprep.subr.bf16.mxu0 0
  %907 = vmatpush1.bf16.msra.mxu0 0
  %908 = vmatprep.subr.bf16.mxu0 0
  %909 = vmatpush1.bf16.msra.mxu0 0
  %910 = vmatprep.subr.bf16.mxu0 0
  %911 = vmatpush1.bf16.msra.mxu0 0
  %912 = vmatprep.subr.bf16.mxu0 0
  %913 = vmatpush1.bf16.msra.mxu0 0
  %914 = vmatprep.subr.bf16.mxu0 0
  %915 = vmatpush1.bf16.msra.mxu0 0
  %916 = vmatprep.subr.bf16.mxu0 0
  %917 = vmatpush1.bf16.msra.mxu0 0
  %918 = vmatprep.subr.bf16.mxu0 0
  %919 = vmatpush1.bf16.msra.mxu0 0
  %920 = vmatprep.mubr.bf16.mxu0 0
  %921 = vmatmul.mubr.bf16.gmra.mrb[0].mxu0 %v645
  %v922 = vpop.f32.mrb[0].mxu0
  %v923 = vadd.f32 %v882, %v922
  %v924 = vpop.f32.mrb[0].mxu0
  %v925 = vpop.f32.mrb[0].mxu0
  %v926 = vadd.f32 %v885, %v925
  %v927 = vpop.f32.mrb[0].mxu0
  %928 = vdwg.mxu0
  %929 = vst [vmem:[%s6] sm:$0xff] %v923
  %930 = vst [vmem:[%s6 + $0x8] sm:$0xff] %v926
  // Predicated region
  $region26: #{wtfusion_forward.2} parent=0 // pred_check
    _
  $region27: #{wtfusion_forward.2} parent=0 // pred_check_branch
    %932 = sbr.rel (0) target = $region29
  $region28: #{wtfusion_forward.2} parent=0 // pred_region
    _
  $region29: #{wtfusion_forward.2} parent=0 // pred_fallthru
    _
  // Predicated region
  $region30: #{wtfusion_forward.2} parent=0 // pred_check
    _
  $region31: #{wtfusion_forward.2} parent=0 // pred_check_branch
    %934 = sbr.rel (0) target = $region33
  $region32: #{wtfusion_forward.2} parent=0 // pred_region
    _
  $region33: #{wtfusion_forward.2} parent=0 // pred_fallthru
    _

</llo_original>
